<compile_context>
chip_gen: v5e
topology: v5e:2x2
jax: 0.10.0
libtpu: 0.0.40
codegen_flags: <defaults>
</compile_context>

<pallas_src>
import jax
import jax.numpy as jnp
from jax.experimental import pallas as pl
from jax.experimental.pallas import tpu as pltpu


# ----------------------------------------------------------------------------
# Kernels
# ----------------------------------------------------------------------------

_DN = (((1,), (1,)), ((), ()))  # contract x(M,K) with w(N,K) on K (trans_b)


def _dot_nt(x, w):
    # TODO(synk): if lowering ever shows a per-tile vxpose for the trans_b
    # contraction, cache a one-time (K, N) relayout of the weight instead.
    return jax.lax.dot_general(
        x,
        w,
        dimension_numbers=_DN,
        preferred_element_type=jnp.float32,
        precision=jax.lax.Precision.HIGHEST,
    )


def _direct_kernel(x_ref, w_ref, o_ref):
    """No K reduction: write the dot result straight to the output block."""
    o_ref[...] = _dot_nt(x_ref[...], w_ref[...]).astype(o_ref.dtype)


def _tiled_kernel(x_ref, w_ref, o_ref, acc_ref):
    """3-D tiled matmul with f32 VMEM accumulator over the K grid axis."""
    k = pl.program_id(2)
    partial = _dot_nt(x_ref[...], w_ref[...])

    @pl.when(k == 0)
    def _():
        acc_ref[...] = partial          # direct write: no zero-fill + '+='

    @pl.when(k != 0)
    def _():
        acc_ref[...] += partial

    @pl.when(k == pl.num_programs(2) - 1)
    def _():
        o_ref[...] = acc_ref[...].astype(o_ref.dtype)


# ----------------------------------------------------------------------------
# Generation-aware configuration
# ----------------------------------------------------------------------------

def _vmem_capacity_bytes():
    try:
        info = pltpu.get_tpu_info()
        cap = getattr(info, "vmem_capacity_bytes", None)
        if cap:
            return int(cap)
    except Exception:
        pass
    return 64 * 1024 * 1024  # conservative default (v7x per-TC)


_VMEM_BYTES = _vmem_capacity_bytes()
_BIG_VMEM = _VMEM_BYTES >= 100 * 1024 * 1024          # v5e/v6e: 128 MiB; v7x: 64 MiB
_VMEM_LIMIT = int(min(_VMEM_BYTES // 2, 100 * 1024 * 1024))


def _round_up(v, m):
    return ((v + m - 1) // m) * m


# ----------------------------------------------------------------------------
# Forward
# ----------------------------------------------------------------------------

@jax.jit
def nn_model_forward(x, weight):
    """x: (B, n_input) f32; weight: (n_output, n_input) f32 (PyTorch layout)."""
    M, K = x.shape
    N, Kw = weight.shape
    assert K == Kw, "n_input mismatch between x and weight"

    itemsize = 4  # f32

    # ---------------- Fast path: everything fits in one VMEM block ----------
    # Full-array block shapes are exempt from the (8,128) rule, so no padding,
    # no grid, no accumulator, no output slice.
    total_bytes = (M * K + N * K + M * N) * itemsize
    if total_bytes <= 4 * 1024 * 1024:
        return pl.pallas_call(
            _direct_kernel,
            out_shape=jax.ShapeDtypeStruct((M, N), x.dtype),
        )(x, weight)

    # ---------------- Small-batch path: resident x, stream W over N ---------
    # Weight-bandwidth-bound regime: keep x (M, K) resident, stream (tn, K)
    # weight tiles on a 1-D grid over N, no K axis, no accumulator scratch.
    if M <= 256:
        Np = _round_up(N, 128)
        tn_cap = 512 if _BIG_VMEM else 256
        tn = min(tn_cap, Np)
        while Np % tn != 0:
            tn -= 128
        # Give both v7x TensorCores work when possible (>= 2 N blocks).
        if Np // tn < 2 and Np >= 256:
            tn = max(128, tn // 2)
        working_set = (M * K + 2 * tn * K + 2 * M * tn) * itemsize
        if working_set <= int(_VMEM_LIMIT * 0.8):
            wp = weight if Np == N else jnp.pad(weight, ((0, 0), (0, 0)) if False else
                                                ((0, Np - N), (0, 0)))
            out_p = pl.pallas_call(
                _direct_kernel,
                out_shape=jax.ShapeDtypeStruct((M, Np), x.dtype),
                grid_spec=pltpu.PrefetchScalarGridSpec(
                    num_scalar_prefetch=0,
                    grid=(Np // tn,),
                    in_specs=[
                        pl.BlockSpec((M, K), lambda j: (0, 0)),   # x resident
                        pl.BlockSpec((tn, K), lambda j: (j, 0)),  # stream W
                    ],
                    out_specs=pl.BlockSpec((M, tn), lambda j: (0, j)),
                ),
                compiler_params=pltpu.CompilerParams(
                    dimension_semantics=("parallel",),
                    vmem_limit_bytes=_VMEM_LIMIT,
                ),
            )(x, wp)
            return out_p if Np == N else out_p[:, :N]

    # ---------------- General tiled path -----------------------------------
    cap_mn = 512 if _BIG_VMEM else 256
    cap_k = 1024 if _BIG_VMEM else 512
    tm = min(cap_mn, _round_up(M, 8))
    tn = min(cap_mn, _round_up(N, 128))
    tk = min(cap_k, _round_up(K, 128))

    Mp, Np, Kp = _round_up(M, tm), _round_up(N, tn), _round_up(K, tk)
    xp = x if (Mp == M and Kp == K) else jnp.pad(x, ((0, Mp - M), (0, Kp - K)))
    wp = weight if (Np == N and Kp == K) else jnp.pad(
        weight, ((0, Np - N), (0, Kp - K))
    )

    nk = Kp // tk
    if nk == 1:
        # No K reduction: 2-D grid, write directly, no accumulator.
        out_p = pl.pallas_call(
            _direct_kernel,
            out_shape=jax.ShapeDtypeStruct((Mp, Np), x.dtype),
            grid_spec=pltpu.PrefetchScalarGridSpec(
                num_scalar_prefetch=0,
                grid=(Mp // tm, Np // tn),
                in_specs=[
                    pl.BlockSpec((tm, Kp), lambda i, j: (i, 0)),
                    pl.BlockSpec((tn, Kp), lambda i, j: (j, 0)),
                ],
                out_specs=pl.BlockSpec((tm, tn), lambda i, j: (i, j)),
            ),
            compiler_params=pltpu.CompilerParams(
                dimension_semantics=("parallel", "parallel"),
                vmem_limit_bytes=_VMEM_LIMIT,
            ),
        )(xp, wp)
    else:
        out_p = pl.pallas_call(
            _tiled_kernel,
            out_shape=jax.ShapeDtypeStruct((Mp, Np), x.dtype),
            grid_spec=pltpu.PrefetchScalarGridSpec(
                num_scalar_prefetch=0,
                grid=(Mp // tm, Np // tn, nk),
                in_specs=[
                    pl.BlockSpec((tm, tk), lambda i, j, k: (i, k)),
                    pl.BlockSpec((tn, tk), lambda i, j, k: (j, k)),
                ],
                out_specs=pl.BlockSpec((tm, tn), lambda i, j, k: (i, j)),
                scratch_shapes=[pltpu.VMEM((tm, tn), jnp.float32)],
            ),
            compiler_params=pltpu.CompilerParams(
                dimension_semantics=("parallel", "parallel", "arbitrary"),
                vmem_limit_bytes=_VMEM_LIMIT,
            ),
        )(xp, wp)

    return out_p if (Mp == M and Np == N) else out_p[:M, :N]


if __name__ == "__main__":
    # Small shapes consistent with the module's forward: batch=8, n_input=32, n_output=16
    B, n_input, n_output = 8, 32, 16

    key = jax.random.PRNGKey(0)
    kx, kw = jax.random.split(key)

    x = jax.random.normal(kx, (B, n_input), dtype=jnp.float32)
    # nn.Linear default init: uniform(-1/sqrt(fan_in), 1/sqrt(fan_in)), no bias
    bound = 1.0 / float(n_input) ** 0.5
    weight = jax.random.uniform(
        kw, (n_output, n_input), minval=-bound, maxval=bound, dtype=jnp.float32
    )

    out = nn_model_forward(x, weight)
    out = jax.block_until_ready(out)

    # Cross-check against plain JAX reference (x @ W.T, no bias)
    ref = x @ weight.T
    assert out.shape == (B, n_output)
    assert jnp.allclose(out, ref, atol=1e-5, rtol=1e-5)

    print("KERNEL_OK")
</pallas_src>

<mosaic_0001>
module attributes {stable_mosaic.version = 11 : i64} {
  func.func @_direct_kernel(%arg0: memref<8x32xf32, #tpu.memory_space<vmem>>, %arg1: memref<16x32xf32, #tpu.memory_space<vmem>>, %arg2: memref<8x16xf32, #tpu.memory_space<vmem>>) attributes {dimension_semantics = [], scalar_prefetch = 0 : i64, scratch_operands = 0 : i64, tpu.core_type = #tpu.core_type<tc>} {
    %c0 = arith.constant 0 : index
    %c0_0 = arith.constant 0 : index
    %0 = vector.load %arg0[%c0, %c0_0] : memref<8x32xf32, #tpu.memory_space<vmem>>, vector<8x32xf32>
    %c0_1 = arith.constant 0 : index
    %c0_2 = arith.constant 0 : index
    %1 = vector.load %arg1[%c0_1, %c0_2] : memref<16x32xf32, #tpu.memory_space<vmem>>, vector<16x32xf32>
    %cst = arith.constant dense<0.000000e+00> : vector<8x16xf32>
    %2 = tpu.matmul %0, %1, %cst {dimension_numbers = #tpu.dot_dimension_numbers<[1], [1], [0], [0], [0, 0, 1, 0], [], []>, precision = #tpu.contract_precision<fp32>} : vector<8x32xf32>, vector<16x32xf32>, vector<8x16xf32> -> vector<8x16xf32>
    %c0_3 = arith.constant 0 : index
    %c0_4 = arith.constant 0 : index
    %3 = vector.load %arg2[%c0_3, %c0_4] : memref<8x16xf32, #tpu.memory_space<vmem>>, vector<8x16xf32>
    tpu.vector_store %arg2[%c0_3, %c0_4], %2 {strides = array<i32>} : memref<8x16xf32, #tpu.memory_space<vmem>>, vector<8x16xf32>,
    return
  }
}

</mosaic_0001>

<llo_original>
// kernel: nn_model_forward.1
$region0: #{nn_model_forward.1}
  #allocation0 [shape = 'u32[]', space=smem, size = 0x4, offset = 0x4, fixed_abs, tag = 'smem constant byte address 0x4 - core index']
  #allocation1 [shape = 'u32[72,128]{1,0:T(1,128)}', space=vmem, size = 0x9000, scoped, tag = 'internal scratch']
  %s0 = inlined_call_operand.hbm [shape: f32[8,32], index: 0, kind: input, shape index: {}]
  %s1 = inlined_call_operand.hbm [shape: f32[16,32], index: 1, kind: input, shape index: {}]
  %s2 = inlined_call_operand.hbm [shape: f32[8,16], index: 2, kind: output, shape index: {}]
  %s3 = sld [smem:[#allocation0]]
  $region26: #{nn_model_forward.1} parent=0
    _
  %s5 = ssub.s32 1, %s3
  %s6 = scalar_select 0, %s5, %s3
  $region1: #{nn_model_forward.1} parent=0
    #allocation2 [shape = 'u8[4096]{0}', space=vmem, size = 0x1000, scoped, tag = 'input window, operand 0, single buffered']
    #allocation3 [shape = 's32[1]{0}', space=sflag, size = 0x4, scoped, tag = 'scoped memory for nn_model_forward.1']
    #allocation4 [shape = 's32[1]{0}', space=sflag, size = 0x4, scoped, tag = 'scoped memory for nn_model_forward.1']
    #allocation5 [shape = 'u8[8192]{0}', space=vmem, size = 0x2000, scoped, tag = 'input window, operand 1, single buffered']
    #allocation6 [shape = 's32[1]{0}', space=sflag, size = 0x4, scoped, tag = 'scoped memory for nn_model_forward.1']
    #allocation7 [shape = 'u8[4096]{0}', space=vmem, size = 0x1000, scoped, tag = 'output window, operand 0, single buffered']
    %7 = vsyncpa [#allocation3], 0
    %8 = vsyncpa [#allocation6], 0
    %9 = vsyncpa [#allocation4], 0
    // Predicated region
    $region2: #{nn_model_forward.1} parent=1 // pred_check
      _
    $region3: #{nn_model_forward.1} parent=1 // pred_check_branch
      %11 = sbr.rel (0) target = $region5
    $region4: #{nn_model_forward.1} parent=1 // pred_region
      %13 = vsyncadd [#allocation3], 0
      %s15 = sshll.u32 %s0, 4
      %s16 = int_to_ptr.hbm [resolvable:$true] %s15
      %s17 = sshll.u32 [#allocation2], 4
      %s18 = int_to_ptr.vmem [resolvable:$true] %s17
      %20 = dma.hbm_to_vmem [thread:$0]  %s16, 128, %s18, [#allocation3]
    $region5: #{nn_model_forward.1} parent=1 // pred_fallthru
      _
    // Predicated region
    $region6: #{nn_model_forward.1} parent=1 // pred_check
      _
    $region7: #{nn_model_forward.1} parent=1 // pred_check_branch
      %22 = sbr.rel (0) target = $region9
    $region8: #{nn_model_forward.1} parent=1 // pred_region
      %24 = vsyncadd [#allocation6], 0
      %s25 = sshll.u32 %s1, 4
      %s26 = int_to_ptr.hbm [resolvable:$true] %s25
      %s27 = sshll.u32 [#allocation5], 4
      %s28 = int_to_ptr.vmem [resolvable:$true] %s27
      %33 = dma.hbm_to_vmem [thread:$0]  %s26, 256, %s28, [#allocation6], 128, 128, 8
    $region9: #{nn_model_forward.1} parent=1 // pred_fallthru
      _
    // Predicated region
    $region10: #{nn_model_forward.1} parent=1 // pred_check
      _
    $region11: #{nn_model_forward.1} parent=1 // pred_check_branch
      %35 = sbr.rel (0) target = $region13
    $region12: #{nn_model_forward.1} parent=1 // pred_region
      %37 = dma.done [#allocation3], 128
    $region13: #{nn_model_forward.1} parent=1 // pred_fallthru
      _
    // Predicated region
    $region14: #{nn_model_forward.1} parent=1 // pred_check
      _
    $region15: #{nn_model_forward.1} parent=1 // pred_check_branch
      %39 = sbr.rel (0) target = $region17
    $region16: #{nn_model_forward.1} parent=1 // pred_region
      %41 = dma.done [#allocation6], 256
    $region17: #{nn_model_forward.1} parent=1 // pred_fallthru
      _
    %v42 = vld [vmem:[#allocation2] sm:$0xff]
    %v43 = vld [vmem:[#allocation5] sm:$0xff]
    %v44 = vld [vmem:[#allocation5 + $0x8] sm:$0xff]
    %vm45 = vcmask 261120
    %v47 = vsel %vm45, %v42, 0
    %v50 = vsel %vm45, %v43, 0
    %v53 = vsel %vm45, %v44, 0
    %55 = vmatpush.xpose.msra.mxu0 0.0
    %56 = vmatpush.xpose.msra.mxu0 0.0
    %57 = vmatpush.xpose.msra.mxu0 0.0
    %58 = vmatpush.xpose.msra.mxu0 0.0
    %59 = vmatpush.xpose.msra.mxu0 0.0
    %60 = vmatpush.xpose.msra.mxu0 0.0
    %61 = vmatpush.xpose.msra.mxu0 0.0
    %62 = vmatpush.xpose.msra.mxu0 0.0
    %63 = vmatpush.xpose.msra.mxu0 0.0
    %64 = vmatpush.xpose.msra.mxu0 0.0
    %65 = vmatpush.xpose.msra.mxu0 0.0
    %66 = vmatpush.xpose.msra.mxu0 0.0
    %67 = vmatpush.xpose.msra.mxu0 0.0
    %68 = vmatpush.xpose.msra.mxu0 0.0
    %v69 = vand.u32 %v53, 4294901760
    %70 = vmatpush.xpose.msra.mxu0 %v69
    %v71 = vand.u32 %v50, 4294901760
    %72 = vmatpush.xpose.msra.mxu0 %v71
    %v73 = vand.u32 %v47, 4294901760
    %v74 = vsub.f32 %v47, %v73
    %v75 = vand.u32 %v74, 4294901760
    %v76 = vsub.f32 %v74, %v75
    %v77 = vand.u32 %v76, 4294901760
    %78 = vmatmul.f32.gmra.mxu0 %v77
    %v79 = vpop.f32.mrf.mxu0
    %v80 = vadd.f32 0.0, %v79
    %81 = vdwg.mxu0
    %82 = vmatpush.xpose.msra.mxu0 0.0
    %83 = vmatpush.xpose.msra.mxu0 0.0
    %84 = vmatpush.xpose.msra.mxu0 0.0
    %85 = vmatpush.xpose.msra.mxu0 0.0
    %86 = vmatpush.xpose.msra.mxu0 0.0
    %87 = vmatpush.xpose.msra.mxu0 0.0
    %88 = vmatpush.xpose.msra.mxu0 0.0
    %89 = vmatpush.xpose.msra.mxu0 0.0
    %90 = vmatpush.xpose.msra.mxu0 0.0
    %91 = vmatpush.xpose.msra.mxu0 0.0
    %92 = vmatpush.xpose.msra.mxu0 0.0
    %93 = vmatpush.xpose.msra.mxu0 0.0
    %94 = vmatpush.xpose.msra.mxu0 0.0
    %95 = vmatpush.xpose.msra.mxu0 0.0
    %v96 = vand.u32 %v53, 4294901760
    %v97 = vsub.f32 %v53, %v96
    %v98 = vand.u32 %v97, 4294901760
    %v99 = vsub.f32 %v97, %v98
    %v100 = vand.u32 %v99, 4294901760
    %101 = vmatpush.xpose.msra.mxu0 %v100
    %v102 = vand.u32 %v50, 4294901760
    %v103 = vsub.f32 %v50, %v102
    %v104 = vand.u32 %v103, 4294901760
    %v105 = vsub.f32 %v103, %v104
    %v106 = vand.u32 %v105, 4294901760
    %107 = vmatpush.xpose.msra.mxu0 %v106
    %v108 = vand.u32 %v47, 4294901760
    %109 = vmatmul.f32.gmra.mxu0 %v108
    %v110 = vpop.f32.mrf.mxu0
    %v111 = vadd.f32 %v80, %v110
    %112 = vdwg.mxu0
    %113 = vmatpush.xpose.msra.mxu0 0.0
    %114 = vmatpush.xpose.msra.mxu0 0.0
    %115 = vmatpush.xpose.msra.mxu0 0.0
    %116 = vmatpush.xpose.msra.mxu0 0.0
    %117 = vmatpush.xpose.msra.mxu0 0.0
    %118 = vmatpush.xpose.msra.mxu0 0.0
    %119 = vmatpush.xpose.msra.mxu0 0.0
    %120 = vmatpush.xpose.msra.mxu0 0.0
    %121 = vmatpush.xpose.msra.mxu0 0.0
    %122 = vmatpush.xpose.msra.mxu0 0.0
    %123 = vmatpush.xpose.msra.mxu0 0.0
    %124 = vmatpush.xpose.msra.mxu0 0.0
    %125 = vmatpush.xpose.msra.mxu0 0.0
    %126 = vmatpush.xpose.msra.mxu0 0.0
    %v127 = vand.u32 %v53, 4294901760
    %v128 = vsub.f32 %v53, %v127
    %129 = vmatpush.xpose.msra.mxu0 %v128
    %v130 = vand.u32 %v50, 4294901760
    %v131 = vsub.f32 %v50, %v130
    %132 = vmatpush.xpose.msra.mxu0 %v131
    %v133 = vand.u32 %v47, 4294901760
    %v134 = vsub.f32 %v47, %v133
    %135 = vmatmul.f32.gmra.mxu0 %v134
    %v136 = vpop.f32.mrf.mxu0
    %v137 = vadd.f32 %v111, %v136
    %138 = vdwg.mxu0
    %139 = vmatpush.xpose.msra.mxu0 0.0
    %140 = vmatpush.xpose.msra.mxu0 0.0
    %141 = vmatpush.xpose.msra.mxu0 0.0
    %142 = vmatpush.xpose.msra.mxu0 0.0
    %143 = vmatpush.xpose.msra.mxu0 0.0
    %144 = vmatpush.xpose.msra.mxu0 0.0
    %145 = vmatpush.xpose.msra.mxu0 0.0
    %146 = vmatpush.xpose.msra.mxu0 0.0
    %147 = vmatpush.xpose.msra.mxu0 0.0
    %148 = vmatpush.xpose.msra.mxu0 0.0
    %149 = vmatpush.xpose.msra.mxu0 0.0
    %150 = vmatpush.xpose.msra.mxu0 0.0
    %151 = vmatpush.xpose.msra.mxu0 0.0
    %152 = vmatpush.xpose.msra.mxu0 0.0
    %v153 = vand.u32 %v53, 4294901760
    %154 = vmatpush.xpose.msra.mxu0 %v153
    %v155 = vand.u32 %v50, 4294901760
    %156 = vmatpush.xpose.msra.mxu0 %v155
    %v157 = vand.u32 %v47, 4294901760
    %v158 = vsub.f32 %v47, %v157
    %v159 = vand.u32 %v158, 4294901760
    %160 = vmatmul.f32.gmra.mxu0 %v159
    %v161 = vpop.f32.mrf.mxu0
    %v162 = vadd.f32 %v137, %v161
    %163 = vdwg.mxu0
    %164 = vmatpush.xpose.msra.mxu0 0.0
    %165 = vmatpush.xpose.msra.mxu0 0.0
    %166 = vmatpush.xpose.msra.mxu0 0.0
    %167 = vmatpush.xpose.msra.mxu0 0.0
    %168 = vmatpush.xpose.msra.mxu0 0.0
    %169 = vmatpush.xpose.msra.mxu0 0.0
    %170 = vmatpush.xpose.msra.mxu0 0.0
    %171 = vmatpush.xpose.msra.mxu0 0.0
    %172 = vmatpush.xpose.msra.mxu0 0.0
    %173 = vmatpush.xpose.msra.mxu0 0.0
    %174 = vmatpush.xpose.msra.mxu0 0.0
    %175 = vmatpush.xpose.msra.mxu0 0.0
    %176 = vmatpush.xpose.msra.mxu0 0.0
    %177 = vmatpush.xpose.msra.mxu0 0.0
    %v178 = vand.u32 %v53, 4294901760
    %v179 = vsub.f32 %v53, %v178
    %v180 = vand.u32 %v179, 4294901760
    %181 = vmatpush.xpose.msra.mxu0 %v180
    %v182 = vand.u32 %v50, 4294901760
    %v183 = vsub.f32 %v50, %v182
    %v184 = vand.u32 %v183, 4294901760
    %185 = vmatpush.xpose.msra.mxu0 %v184
    %v186 = vand.u32 %v47, 4294901760
    %187 = vmatmul.f32.gmra.mxu0 %v186
    %v188 = vpop.f32.mrf.mxu0
    %v189 = vadd.f32 %v162, %v188
    %190 = vdwg.mxu0
    %191 = vmatpush.xpose.msra.mxu0 0.0
    %192 = vmatpush.xpose.msra.mxu0 0.0
    %193 = vmatpush.xpose.msra.mxu0 0.0
    %194 = vmatpush.xpose.msra.mxu0 0.0
    %195 = vmatpush.xpose.msra.mxu0 0.0
    %196 = vmatpush.xpose.msra.mxu0 0.0
    %197 = vmatpush.xpose.msra.mxu0 0.0
    %198 = vmatpush.xpose.msra.mxu0 0.0
    %199 = vmatpush.xpose.msra.mxu0 0.0
    %200 = vmatpush.xpose.msra.mxu0 0.0
    %201 = vmatpush.xpose.msra.mxu0 0.0
    %202 = vmatpush.xpose.msra.mxu0 0.0
    %203 = vmatpush.xpose.msra.mxu0 0.0
    %204 = vmatpush.xpose.msra.mxu0 0.0
    %v205 = vand.u32 %v53, 4294901760
    %206 = vmatpush.xpose.msra.mxu0 %v205
    %v207 = vand.u32 %v50, 4294901760
    %208 = vmatpush.xpose.msra.mxu0 %v207
    %v209 = vand.u32 %v47, 4294901760
    %210 = vmatmul.f32.gmra.mxu0 %v209
    %v211 = vpop.f32.mrf.mxu0
    %v212 = vadd.f32 %v189, %v211
    %213 = vdwg.mxu0
    %vm214 = vcmask 130048
    %215 = vst.msk [vmem:[#allocation7] sm:$0xff] %vm214, %v212
    // Predicated region
    $region18: #{nn_model_forward.1} parent=1 // pred_check
      _
    $region19: #{nn_model_forward.1} parent=1 // pred_check_branch
      %217 = sbr.rel (0) target = $region21
    $region20: #{nn_model_forward.1} parent=1 // pred_region
      %219 = vsyncadd [#allocation4], 0
      %s221 = sshll.u32 [#allocation7], 4
      %s222 = int_to_ptr.vmem [resolvable:$true] %s221
      %s223 = sshll.u32 %s2, 4
      %s224 = int_to_ptr.hbm [resolvable:$true] %s223
      %226 = dma.vmem_to_hbm [thread:$0]  %s222, 128, %s224, [#allocation4]
    $region21: #{nn_model_forward.1} parent=1 // pred_fallthru
      _
    // Predicated region
    $region22: #{nn_model_forward.1} parent=1 // pred_check
      _
    $region23: #{nn_model_forward.1} parent=1 // pred_check_branch
      %228 = sbr.rel (0) target = $region25
    $region24: #{nn_model_forward.1} parent=1 // pred_region
      %230 = dma.done [#allocation4], 128
    $region25: #{nn_model_forward.1} parent=1 // pred_fallthru
      _
    %231 = vsyncpa [#allocation3], 1
    %232 = vsyncpa [#allocation6], 1
    %233 = vsyncpa [#allocation4], 1

</llo_original>
